<compile_context>
chip_gen: v7x
topology: tpu7x:2x2x1
jax: 0.10.0
libtpu: 0.0.40
codegen_flags: <defaults>
</compile_context>

<pallas_src>
import jax
import jax.numpy as jnp
from jax.experimental import pallas as pl
from jax.experimental.pallas import tpu as pltpu


def _round_up(x, m):
    return ((x + m - 1) // m) * m


def _chip_traits():
    """Best-effort chip detection; conservative fallbacks never hurt correctness."""
    kind = ""
    try:
        kind = jax.devices()[0].device_kind.lower()
    except Exception:
        pass
    dual_tc = any(t in kind for t in ("v4", "v5p", "v7", "7x"))
    big_vmem = any(t in kind for t in ("v5e", "v5 lite", "v5lite",
                                       "v6e", "v6 lite", "v6lite"))
    return dual_tc, big_vmem


def weighted_tv_loss(pred, weight=None, loss_weight=1.0, reduction="mean"):
    """JAX/Pallas equivalent of basicsr WeightedTVLoss.forward.

    pred:   (N, C, H, W)
    weight: optional (N, C, H, W) elementwise weights
    Returns a scalar (float32).
    """
    if reduction not in ("mean", "sum"):
        raise ValueError("Unsupported reduction mode. Supported ones are: mean | sum")

    N, C, H, W = pred.shape
    NC, HW = N * C, H * W
    # TODO(synk): H == 1 (zero-width y-diff scratch) and very large single
    # images (H*W bigger than one VMEM block) are not handled; the latter would
    # need intra-image (lane-axis) tiling with a W-element halo column.

    dual_tc, big_vmem = _chip_traits()

    # ------------------------- tiling decisions -------------------------
    itemsize = int(jnp.dtype(pred.dtype).itemsize)
    sub = max(8, 32 // itemsize)                 # sublane packing: 8/16/32 rows
    target_block_bytes = (4 if big_vmem else 2) * 1024 * 1024
    vmem_limit = (64 if big_vmem else 32) * 1024 * 1024

    rows_fit = max(sub, (target_block_bytes // (HW * itemsize)) // sub * sub)
    tb = int(min(rows_fit, _round_up(NC, sub)))  # rows per block (multiple of 8)
    chunks = -(-NC // tb)                        # real blocks covering NC rows
    last_block = chunks - 1

    NUM_SPLIT = 2 if (dual_tc and chunks >= 2) else 1
    cpc = -(-chunks // NUM_SPLIT)                # chunks per core

    # Lane-dense flattening only; NO padding (ragged block masked in-kernel).
    p = pred.reshape(NC, HW)
    wt = None if weight is None else weight.reshape(NC, HW)

    wy_width = HW - W        # valid flattened positions for vertical pairs
    wx_width = HW - 1        # candidate flattened positions for horizontal pairs
    weighted = weight is not None
    nsum = 4 if weighted else 2
    f32 = jnp.float32

    # ------------------------------ kernel ------------------------------
    def _fold8(v):
        # (tb, width) -> (8, width): value-only adds over sublane groups, so the
        # small (8, width) accumulator gets a single read-modify-write per step.
        out = v[0:8]
        for g in range(1, tb // 8):
            out = out + v[g * 8:(g + 1) * 8]
        return out

    def _xmask():
        # Horizontal pair (k, k+1) is valid iff k is not the last column of its
        # image row, i.e. (k % W) != W - 1. Applied once, at finalize.
        lane = jax.lax.broadcasted_iota(jnp.int32, (1, wx_width), 1)
        return (lane % W != (W - 1)).astype(f32)

    def kernel(*args):
        if weighted:
            p_ref, w_ref, out_ref, acc_y, acc_x, acc_wy, acc_wx = args
        else:
            p_ref, out_ref, acc_y, acc_x = args
            w_ref = acc_wy = acc_wx = None

        c = pl.program_id(0)
        i = pl.program_id(1)
        idx = c * cpc + i              # logical (unclamped) chunk index
        nvalid = NC - idx * tb         # how many rows of this block are real

        @pl.when(i == 0)
        def _init():
            acc_y[...] = jnp.zeros_like(acc_y)
            acc_x[...] = jnp.zeros_like(acc_x)
            if weighted:
                acc_wy[...] = jnp.zeros_like(acc_wy)
                acc_wx[...] = jnp.zeros_like(acc_wx)

        def _accum(mask_rows):
            x = p_ref[...].astype(f32)
            w = w_ref[...].astype(f32) if weighted else None
            if mask_rows:
                row = jax.lax.broadcasted_iota(jnp.int32, (tb, 1), 0)
                m = row < nvalid
                x = jnp.where(m, x, 0.0)
                if weighted:
                    w = jnp.where(m, w, 0.0)
            y_d = jnp.abs(x[:, :wy_width] - x[:, W:])   # (tb, HW - W)
            x_d = jnp.abs(x[:, :wx_width] - x[:, 1:])   # (tb, HW - 1)
            if weighted:
                wy = w[:, :wy_width]
                wx = w[:, :wx_width]
                acc_y[...] += _fold8(y_d * wy)
                acc_x[...] += _fold8(x_d * wx)          # x-column mask deferred
                acc_wy[...] += _fold8(wy)
                acc_wx[...] += _fold8(wx)
            else:
                acc_y[...] += _fold8(y_d)
                acc_x[...] += _fold8(x_d)

        @pl.when(nvalid >= tb)          # common case: full block, no row mask
        def _full():
            _accum(False)

        @pl.when(nvalid < tb)           # ragged last / duplicated extra block
        def _partial():
            _accum(True)

        @pl.when(i == pl.num_programs(1) - 1)
        def _fin():
            xm = _xmask()
            out_ref[0, 0] = jnp.full((8, 128), jnp.sum(acc_y[...]), f32)
            out_ref[0, 1] = jnp.full((8, 128), jnp.sum(acc_x[...] * xm), f32)
            if weighted:
                out_ref[0, 2] = jnp.full((8, 128), jnp.sum(acc_wy[...]), f32)
                out_ref[0, 3] = jnp.full((8, 128), jnp.sum(acc_wx[...] * xm), f32)

    # ----------------------------- pallas_call ----------------------------
    def in_map(c, i):
        # Clamp to the last real block; invalid/overflow rows are masked in the
        # kernel using the *unclamped* index, so this never double-counts.
        return (jnp.minimum(c * cpc + i, last_block), 0)

    in_spec = pl.BlockSpec((tb, HW), in_map)
    out_spec = pl.BlockSpec((1, nsum, 8, 128), lambda c, i: (c, 0, 0, 0))
    out_shape = jax.ShapeDtypeStruct((NUM_SPLIT, nsum, 8, 128), f32)
    grid = (NUM_SPLIT, cpc)
    cparams = pltpu.CompilerParams(
        dimension_semantics=("parallel", "arbitrary"),
        vmem_limit_bytes=vmem_limit,
    )

    scratch = [pltpu.VMEM((8, wy_width), f32), pltpu.VMEM((8, wx_width), f32)]
    if weighted:
        scratch += [pltpu.VMEM((8, wy_width), f32), pltpu.VMEM((8, wx_width), f32)]
    in_specs = [in_spec, in_spec] if weighted else [in_spec]
    call_args = (p, wt) if weighted else (p,)

    out = pl.pallas_call(
        kernel,
        out_shape=out_shape,
        grid_spec=pltpu.PrefetchScalarGridSpec(
            num_scalar_prefetch=0,
            grid=grid,
            in_specs=in_specs,
            out_specs=out_spec,
            scratch_shapes=scratch,
        ),
        compiler_params=cparams,
    )(*call_args)

    # Cheap scalar glue: combine per-core partial sums and apply the reduction.
    sums = jnp.sum(out[:, :, 0, 0], axis=0)     # (nsum,)
    ysum, xsum = sums[0], sums[1]
    if reduction == "mean":
        if weighted:
            # basicsr weight_reduce_loss: weighted mean divides by weight.sum().
            y_loss = ysum / sums[2]
            x_loss = xsum / sums[3]
        else:
            y_loss = ysum / jnp.float32(NC * (H - 1) * W)
            x_loss = xsum / jnp.float32(NC * H * (W - 1))
    else:  # sum
        y_loss, x_loss = ysum, xsum

    lw = jnp.float32(loss_weight)
    # loss = loss_weight * x_diff_loss + loss_weight * y_diff_loss
    return lw * x_loss + lw * y_loss


# --------------------------- pure-JAX reference -------------------------------


def _ref_weighted_tv_loss(pred, weight=None, loss_weight=1.0, reduction="mean"):
    pred = pred.astype(jnp.float32)
    y_diff = jnp.abs(pred[:, :, :-1, :] - pred[:, :, 1:, :])
    x_diff = jnp.abs(pred[:, :, :, :-1] - pred[:, :, :, 1:])
    if weight is None:
        if reduction == "mean":
            y = jnp.mean(y_diff)
            x = jnp.mean(x_diff)
        else:
            y = jnp.sum(y_diff)
            x = jnp.sum(x_diff)
    else:
        y_w = weight[:, :, :-1, :].astype(jnp.float32)
        x_w = weight[:, :, :, :-1].astype(jnp.float32)
        if reduction == "mean":
            y = jnp.sum(y_diff * y_w) / jnp.sum(y_w)
            x = jnp.sum(x_diff * x_w) / jnp.sum(x_w)
        else:
            y = jnp.sum(y_diff * y_w)
            x = jnp.sum(x_diff * x_w)
    return loss_weight * x + loss_weight * y


# ----------------------------------- main -------------------------------------


if __name__ == "__main__":
    key = jax.random.PRNGKey(0)
    k_pred, k_w = jax.random.split(key)

    N, C, H, W = 2, 4, 16, 16
    pred = jax.random.normal(k_pred, (N, C, H, W), dtype=jnp.float32)
    weight = jax.random.uniform(k_w, (N, C, H, W), dtype=jnp.float32) + 0.1

    # unweighted, mean reduction (module defaults)
    loss = weighted_tv_loss(pred, weight=None, loss_weight=1.0, reduction="mean")
    loss = jax.block_until_ready(loss)
    ref = _ref_weighted_tv_loss(pred, None, 1.0, "mean")
    assert jnp.allclose(loss, ref, rtol=1e-5, atol=1e-5), (loss, ref)

    # weighted, mean reduction
    loss_w = weighted_tv_loss(pred, weight=weight, loss_weight=2.5, reduction="mean")
    loss_w = jax.block_until_ready(loss_w)
    ref_w = _ref_weighted_tv_loss(pred, weight, 2.5, "mean")
    assert jnp.allclose(loss_w, ref_w, rtol=1e-5, atol=1e-5), (loss_w, ref_w)

    # sum reduction
    loss_s = weighted_tv_loss(pred, weight=None, loss_weight=1.0, reduction="sum")
    loss_s = jax.block_until_ready(loss_s)
    ref_s = _ref_weighted_tv_loss(pred, None, 1.0, "sum")
    assert jnp.allclose(loss_s, ref_s, rtol=1e-5, atol=1e-4), (loss_s, ref_s)

    print("KERNEL_OK")
</pallas_src>

<mosaic_0001>
module attributes {stable_mosaic.version = 11 : i64} {
  func.func @kernel(%arg0: i32, %arg1: i32, %arg2: memref<8x256xf32, #tpu.memory_space<vmem>>, %arg3: memref<1x2x8x128xf32, #tpu.memory_space<vmem>>, %arg4: memref<8x240xf32, #tpu.memory_space<vmem>>, %arg5: memref<8x255xf32, #tpu.memory_space<vmem>>) attributes {dimension_semantics = [#tpu.dimension_semantics<parallel>, #tpu.dimension_semantics<arbitrary>], iteration_bounds = array<i64: 1, 1>, scalar_prefetch = 0 : i64, scratch_operands = 2 : i64, tpu.core_type = #tpu.core_type<tc>, window_params = [{transform_indices = @transform_0, window_bounds = array<i64: 8, 256>}, {transform_indices = @transform_1, window_bounds = array<i64: 1, 2, 8, 128>}]} {
    %c1_i32 = arith.constant 1 : i32
    %0 = arith.muli %arg0, %c1_i32 : i32
    %1 = arith.addi %0, %arg1 : i32
    %c8_i32 = arith.constant 8 : i32
    %2 = arith.muli %1, %c8_i32 : i32
    %c8_i32_0 = arith.constant 8 : i32
    %3 = arith.subi %c8_i32_0, %2 : i32
    %c0_i32 = arith.constant 0 : i32
    %4 = arith.cmpi eq, %arg1, %c0_i32 : i32
    %5 = arith.extui %4 : i1 to i32
    %c0_i32_1 = arith.constant 0 : i32
    %6 = arith.cmpi ne, %5, %c0_i32_1 : i32
    scf.if %6 {
      %cst = arith.constant 0.000000e+00 : f32
      %16 = vector.broadcast %cst : f32 to vector<8x240xf32>
      %c0 = arith.constant 0 : index
      %c0_8 = arith.constant 0 : index
      %17 = vector.load %arg4[%c0, %c0_8] : memref<8x240xf32, #tpu.memory_space<vmem>>, vector<8x240xf32>
      tpu.vector_store %arg4[%c0, %c0_8], %16 {strides = array<i32>} : memref<8x240xf32, #tpu.memory_space<vmem>>, vector<8x240xf32>,
      %cst_9 = arith.constant 0.000000e+00 : f32
      %18 = vector.broadcast %cst_9 : f32 to vector<8x255xf32>
      %c0_10 = arith.constant 0 : index
      %c0_11 = arith.constant 0 : index
      %19 = vector.load %arg5[%c0_10, %c0_11] : memref<8x255xf32, #tpu.memory_space<vmem>>, vector<8x255xf32>
      tpu.vector_store %arg5[%c0_10, %c0_11], %18 {strides = array<i32>} : memref<8x255xf32, #tpu.memory_space<vmem>>, vector<8x255xf32>,
    } else {
    }
    %c8_i32_2 = arith.constant 8 : i32
    %7 = arith.cmpi sge, %3, %c8_i32_2 : i32
    %8 = arith.extui %7 : i1 to i32
    %c0_i32_3 = arith.constant 0 : i32
    %9 = arith.cmpi ne, %8, %c0_i32_3 : i32
    scf.if %9 {
      %c0 = arith.constant 0 : index
      %c0_8 = arith.constant 0 : index
      %16 = vector.load %arg2[%c0, %c0_8] : memref<8x256xf32, #tpu.memory_space<vmem>>, vector<8x256xf32>
      %17 = vector.extract_strided_slice %16 {offsets = [0, 0], sizes = [8, 240], strides = [1, 1]} : vector<8x256xf32> to vector<8x240xf32>
      %18 = vector.extract_strided_slice %16 {offsets = [0, 16], sizes = [8, 240], strides = [1, 1]} : vector<8x256xf32> to vector<8x240xf32>
      %19 = arith.subf %17, %18 : vector<8x240xf32>
      %20 = math.absf %19 : vector<8x240xf32>
      %21 = vector.extract_strided_slice %16 {offsets = [0, 0], sizes = [8, 255], strides = [1, 1]} : vector<8x256xf32> to vector<8x255xf32>
      %22 = vector.extract_strided_slice %16 {offsets = [0, 1], sizes = [8, 255], strides = [1, 1]} : vector<8x256xf32> to vector<8x255xf32>
      %23 = arith.subf %21, %22 : vector<8x255xf32>
      %24 = math.absf %23 : vector<8x255xf32>
      %c0_9 = arith.constant 0 : index
      %c0_10 = arith.constant 0 : index
      %25 = vector.load %arg4[%c0_9, %c0_10] : memref<8x240xf32, #tpu.memory_space<vmem>>, vector<8x240xf32>
      %26 = arith.addf %25, %20 : vector<8x240xf32>
      %c0_11 = arith.constant 0 : index
      %c0_12 = arith.constant 0 : index
      %27 = vector.load %arg4[%c0_11, %c0_12] : memref<8x240xf32, #tpu.memory_space<vmem>>, vector<8x240xf32>
      tpu.vector_store %arg4[%c0_11, %c0_12], %26 {strides = array<i32>} : memref<8x240xf32, #tpu.memory_space<vmem>>, vector<8x240xf32>,
      %c0_13 = arith.constant 0 : index
      %c0_14 = arith.constant 0 : index
      %28 = vector.load %arg5[%c0_13, %c0_14] : memref<8x255xf32, #tpu.memory_space<vmem>>, vector<8x255xf32>
      %29 = arith.addf %28, %24 : vector<8x255xf32>
      %c0_15 = arith.constant 0 : index
      %c0_16 = arith.constant 0 : index
      %30 = vector.load %arg5[%c0_15, %c0_16] : memref<8x255xf32, #tpu.memory_space<vmem>>, vector<8x255xf32>
      tpu.vector_store %arg5[%c0_15, %c0_16], %29 {strides = array<i32>} : memref<8x255xf32, #tpu.memory_space<vmem>>, vector<8x255xf32>,
    } else {
    }
    %c8_i32_4 = arith.constant 8 : i32
    %10 = arith.cmpi slt, %3, %c8_i32_4 : i32
    %11 = arith.extui %10 : i1 to i32
    %c0_i32_5 = arith.constant 0 : i32
    %12 = arith.cmpi ne, %11, %c0_i32_5 : i32
    scf.if %12 {
      %c0 = arith.constant 0 : index
      %c0_8 = arith.constant 0 : index
      %16 = vector.load %arg2[%c0, %c0_8] : memref<8x256xf32, #tpu.memory_space<vmem>>, vector<8x256xf32>
      %17 = tpu.iota {dimensions = array<i32: 0>} : vector<8x1xi32>
      %18 = vector.broadcast %3 : i32 to vector<8x1xi32>
      %19 = arith.cmpi slt, %17, %18 : vector<8x1xi32>
      %cst = arith.constant 0.000000e+00 : f32
      %20 = vector.shape_cast %19 : vector<8x1xi1> to vector<8x1xi1>
      %21 = vector.broadcast %20 : vector<8x1xi1> to vector<8x256xi1>
      %22 = vector.broadcast %cst : f32 to vector<8x256xf32>
      %23 = arith.select %21, %16, %22 : vector<8x256xi1>, vector<8x256xf32>
      %24 = vector.extract_strided_slice %23 {offsets = [0, 0], sizes = [8, 240], strides = [1, 1]} : vector<8x256xf32> to vector<8x240xf32>
      %25 = vector.extract_strided_slice %23 {offsets = [0, 16], sizes = [8, 240], strides = [1, 1]} : vector<8x256xf32> to vector<8x240xf32>
      %26 = arith.subf %24, %25 : vector<8x240xf32>
      %27 = math.absf %26 : vector<8x240xf32>
      %28 = vector.extract_strided_slice %23 {offsets = [0, 0], sizes = [8, 255], strides = [1, 1]} : vector<8x256xf32> to vector<8x255xf32>
      %29 = vector.extract_strided_slice %23 {offsets = [0, 1], sizes = [8, 255], strides = [1, 1]} : vector<8x256xf32> to vector<8x255xf32>
      %30 = arith.subf %28, %29 : vector<8x255xf32>
      %31 = math.absf %30 : vector<8x255xf32>
      %c0_9 = arith.constant 0 : index
      %c0_10 = arith.constant 0 : index
      %32 = vector.load %arg4[%c0_9, %c0_10] : memref<8x240xf32, #tpu.memory_space<vmem>>, vector<8x240xf32>
      %33 = arith.addf %32, %27 : vector<8x240xf32>
      %c0_11 = arith.constant 0 : index
      %c0_12 = arith.constant 0 : index
      %34 = vector.load %arg4[%c0_11, %c0_12] : memref<8x240xf32, #tpu.memory_space<vmem>>, vector<8x240xf32>
      tpu.vector_store %arg4[%c0_11, %c0_12], %33 {strides = array<i32>} : memref<8x240xf32, #tpu.memory_space<vmem>>, vector<8x240xf32>,
      %c0_13 = arith.constant 0 : index
      %c0_14 = arith.constant 0 : index
      %35 = vector.load %arg5[%c0_13, %c0_14] : memref<8x255xf32, #tpu.memory_space<vmem>>, vector<8x255xf32>
      %36 = arith.addf %35, %31 : vector<8x255xf32>
      %c0_15 = arith.constant 0 : index
      %c0_16 = arith.constant 0 : index
      %37 = vector.load %arg5[%c0_15, %c0_16] : memref<8x255xf32, #tpu.memory_space<vmem>>, vector<8x255xf32>
      tpu.vector_store %arg5[%c0_15, %c0_16], %36 {strides = array<i32>} : memref<8x255xf32, #tpu.memory_space<vmem>>, vector<8x255xf32>,
    } else {
    }
    %c0_i32_6 = arith.constant 0 : i32
    %13 = arith.cmpi eq, %arg1, %c0_i32_6 : i32
    %14 = arith.extui %13 : i1 to i32
    %c0_i32_7 = arith.constant 0 : i32
    %15 = arith.cmpi ne, %14, %c0_i32_7 : i32
    scf.if %15 {
      %16 = tpu.iota {dimensions = array<i32: 1>} : vector<1x255xi32>
      %c16_i32 = arith.constant 16 : i32
      %c0_i32_8 = arith.constant 0 : i32
      %17 = arith.cmpi eq, %c16_i32, %c0_i32_8 : i32
      %c1_i32_9 = arith.constant 1 : i32
      %18 = arith.select %17, %c1_i32_9, %c16_i32 : i32
      %19 = vector.broadcast %18 : i32 to vector<1x255xi32>
      %20 = arith.remsi %16, %19 : vector<1x255xi32>
      %c0_i32_10 = arith.constant 0 : i32
      %21 = vector.broadcast %c0_i32_10 : i32 to vector<1x255xi32>
      %22 = arith.cmpi ne, %20, %21 : vector<1x255xi32>
      %c0_i32_11 = arith.constant 0 : i32
      %23 = vector.broadcast %c0_i32_11 : i32 to vector<1x255xi32>
      %24 = arith.cmpi slt, %20, %23 : vector<1x255xi32>
      %c0_i32_12 = arith.constant 0 : i32
      %25 = arith.cmpi slt, %18, %c0_i32_12 : i32
      %26 = vector.broadcast %25 : i1 to vector<1x255xi1>
      %27 = vector.broadcast %26 : vector<1x255xi1> to vector<1x255xi1>
      %28 = arith.xori %24, %27 : vector<1x255xi1>
      %29 = arith.andi %28, %22 : vector<1x255xi1>
      %30 = vector.broadcast %18 : i32 to vector<1x255xi32>
      %31 = arith.addi %20, %30 : vector<1x255xi32>
      %32 = arith.select %29, %31, %20 : vector<1x255xi1>, vector<1x255xi32>
      %c15_i32 = arith.constant 15 : i32
      %33 = vector.broadcast %c15_i32 : i32 to vector<1x255xi32>
      %34 = arith.cmpi ne, %32, %33 : vector<1x255xi32>
      %35 = arith.extui %34 : vector<1x255xi1> to vector<1x255xi32>
      %36 = arith.sitofp %35 : vector<1x255xi32> to vector<1x255xf32>
      %c0 = arith.constant 0 : index
      %c0_13 = arith.constant 0 : index
      %37 = vector.load %arg4[%c0, %c0_13] : memref<8x240xf32, #tpu.memory_space<vmem>>, vector<8x240xf32>
      %38 = vector.shape_cast %37 : vector<8x240xf32> to vector<1x8x240xf32>
      %cst = arith.constant dense<0.000000e+00> : vector<1xf32>
      %39 = vector.multi_reduction <add>, %38, %cst [1, 2] : vector<1x8x240xf32> to vector<1xf32>
      %40 = vector.shape_cast %39 : vector<1xf32> to vector<1x1x1xf32>
      %41 = vector.extract %40[0, 0, 0] : f32 from vector<1x1x1xf32>
      %42 = vector.broadcast %41 : f32 to vector<8x128xf32>
      %c0_14 = arith.constant 0 : index
      %c0_15 = arith.constant 0 : index
      %c0_16 = arith.constant 0 : index
      %c0_17 = arith.constant 0 : index
      %43 = vector.load %arg3[%c0_14, %c0_15, %c0_16, %c0_17] : memref<1x2x8x128xf32, #tpu.memory_space<vmem>>, vector<1x1x8x128xf32>
      %44 = vector.shape_cast %43 : vector<1x1x8x128xf32> to vector<8x128xf32>
      %45 = vector.shape_cast %42 : vector<8x128xf32> to vector<1x1x8x128xf32>
      tpu.vector_store %arg3[%c0_14, %c0_15, %c0_16, %c0_17], %45 {strides = array<i32>} : memref<1x2x8x128xf32, #tpu.memory_space<vmem>>, vector<1x1x8x128xf32>,
      %c0_18 = arith.constant 0 : index
      %c0_19 = arith.constant 0 : index
      %46 = vector.load %arg5[%c0_18, %c0_19] : memref<8x255xf32, #tpu.memory_space<vmem>>, vector<8x255xf32>
      %47 = vector.broadcast %36 : vector<1x255xf32> to vector<8x255xf32>
      %48 = arith.mulf %46, %47 : vector<8x255xf32>
      %49 = vector.shape_cast %48 : vector<8x255xf32> to vector<1x8x255xf32>
      %cst_20 = arith.constant dense<0.000000e+00> : vector<1xf32>
      %50 = vector.multi_reduction <add>, %49, %cst_20 [1, 2] : vector<1x8x255xf32> to vector<1xf32>
      %51 = vector.shape_cast %50 : vector<1xf32> to vector<1x1x1xf32>
      %52 = vector.extract %51[0, 0, 0] : f32 from vector<1x1x1xf32>
      %53 = vector.broadcast %52 : f32 to vector<8x128xf32>
      %c0_21 = arith.constant 0 : index
      %c1 = arith.constant 1 : index
      %c0_22 = arith.constant 0 : index
      %c0_23 = arith.constant 0 : index
      %54 = vector.load %arg3[%c0_21, %c1, %c0_22, %c0_23] : memref<1x2x8x128xf32, #tpu.memory_space<vmem>>, vector<1x1x8x128xf32>
      %55 = vector.shape_cast %54 : vector<1x1x8x128xf32> to vector<8x128xf32>
      %56 = vector.shape_cast %53 : vector<8x128xf32> to vector<1x1x8x128xf32>
      tpu.vector_store %arg3[%c0_21, %c1, %c0_22, %c0_23], %56 {strides = array<i32>} : memref<1x2x8x128xf32, #tpu.memory_space<vmem>>, vector<1x1x8x128xf32>,
    } else {
    }
    return
  }
  func.func @transform_0(%arg0: i32, %arg1: i32) -> (i32, i32) {
    %c1_i32 = arith.constant 1 : i32
    %0 = arith.muli %arg0, %c1_i32 : i32
    %1 = arith.addi %0, %arg1 : i32
    %c0_i32 = arith.constant 0 : i32
    %2 = arith.minsi %1, %c0_i32 : i32
    %c0_i32_0 = arith.constant 0 : i32
    %c0_i32_1 = arith.constant 0 : i32
    return %2, %c0_i32_0 : i32, i32
  }
  func.func @transform_1(%arg0: i32, %arg1: i32) -> (i32, i32, i32, i32) {
    %c0_i32 = arith.constant 0 : i32
    %c0_i32_0 = arith.constant 0 : i32
    %c0_i32_1 = arith.constant 0 : i32
    %c0_i32_2 = arith.constant 0 : i32
    return %arg0, %c0_i32, %c0_i32_0, %c0_i32_1 : i32, i32, i32, i32
  }
}

</mosaic_0001>

<llo_original>
// kernel: tpu_custom_call.1
$region0: #{tpu_custom_call.1}
  #allocation0 [shape = 'u32[]', space=smem, size = 0x4, offset = 0x4, fixed_abs, tag = 'smem constant byte address 0x4 - core index']
  #allocation1 [shape = 'u32[144,128]{1,0:T(1,128)}', space=vmem, size = 0x12000, scoped, tag = 'internal scratch']
  #allocation2 [shape = 'f32[8,240]{1,0:T(8,128)}', space=vmem, size = 0x2000, scoped, tag = 'scratch operand']
  #allocation3 [shape = 'f32[8,255]{1,0:T(8,128)}', space=vmem, size = 0x2000, scoped, tag = 'scratch operand']
  %s0 = inlined_call_operand.hbm [shape: f32[8,256], index: 0, kind: input, shape index: {}]
  %s1 = inlined_call_operand.hbm [shape: f32[1,2,8,128], index: 1, kind: output, shape index: {}]
  %s2 = sld [smem:[#allocation0]]
  $region34: #{tpu_custom_call.1} parent=0
    _
  %s4 = ssub.s32 1, %s2
  %s5 = scalar_select 0, %s4, %s2
  $region1: #{tpu_custom_call.1} parent=0
    #allocation4 [shape = 'u8[8192]{0}', space=vmem, size = 0x2000, scoped, tag = 'input window, operand 0, single buffered']
    #allocation5 [shape = 's32[1]{0}', space=sflag, size = 0x4, scoped, tag = 'scoped memory for tpu_custom_call.1']
    #allocation6 [shape = 's32[1]{0}', space=sflag, size = 0x4, scoped, tag = 'scoped memory for tpu_custom_call.1']
    #allocation7 [shape = 'u8[8192]{0}', space=vmem, size = 0x2000, scoped, tag = 'output window, operand 0, single buffered']
    %6 = vsyncpa [#allocation5], 0
    %7 = vsyncpa [#allocation6], 0
    // Predicated region
    $region2: #{tpu_custom_call.1} parent=1 // pred_check
      _
    $region3: #{tpu_custom_call.1} parent=1 // pred_check_branch
      %9 = sbr.rel (0) target = $region5
    $region4: #{tpu_custom_call.1} parent=1 // pred_region
      %s10 = sadd.s32 0, 0
      %p11 = scmp.lt.s32.totalorder %s10, 0
      %s12 = scalar_select %p11, %s10, 0
      %s14 = ssub.s32 256, 256
      %15 = vsyncadd [#allocation5], %s14
      %s16 = smul.addr %s12, 2
      %s17 = smul.addr %s16, 128
      %s18 = scalar_lea.hbm %s0, %s17
      %s20 = sshll.u32 [#allocation4], 4
      %s21 = int_to_ptr.vmem [resolvable:$true] %s20
      %23 = dma.hbm_to_vmem [thread:$0]  %s18, 256, %s21, [#allocation5]
    $region5: #{tpu_custom_call.1} parent=1 // pred_fallthru
      _
    // Predicated region
    $region6: #{tpu_custom_call.1} parent=1 // pred_check
      _
    $region7: #{tpu_custom_call.1} parent=1 // pred_check_branch
      %25 = sbr.rel (0) target = $region9
    $region8: #{tpu_custom_call.1} parent=1 // pred_region
      %26 = dma.done [#allocation5], 256
    $region9: #{tpu_custom_call.1} parent=1 // pred_fallthru
      _
    %s27 = sadd.s32 0, 0
    %p28 = scmp.lt.s32.totalorder %s27, 0
    %s29 = scalar_select %p28, %s27, 0
    %s30 = sadd.s32 0, 0
    %s31 = smul.u32 %s30, 8
    %s32 = ssub.s32 8, %s31
    %p33 = scmp.eq.s32.totalorder 0, 0
    // Predicated region
    $region10: #{tpu_custom_call.1} parent=1 // pred_check
      %p34 = pneg %p33
    $region11: #{tpu_custom_call.1} parent=1 // pred_check_branch
      %36 = sbr.rel (%p34) target = $region13
    $region12: #{tpu_custom_call.1} parent=1 // pred_region
      %37 = vst [vmem:[#allocation2] sm:$0xff] 0.0
      %vm38 = vcmask 916480
      %39 = vst.msk [vmem:[#allocation2 + $0x8] sm:$0xff] %vm38, 0.0
      %40 = vst [vmem:[#allocation3] sm:$0xff] 0.0
      %vm41 = vcmask 1039360
      %42 = vst.msk [vmem:[#allocation3 + $0x8] sm:$0xff] %vm41, 0.0
    $region13: #{tpu_custom_call.1} parent=1 // pred_fallthru
      _
    %p43 = scmp.ge.s32.totalorder %s32, 8
    // Predicated region
    $region14: #{tpu_custom_call.1} parent=1 // pred_check
      %p44 = pneg %p43
    $region15: #{tpu_custom_call.1} parent=1 // pred_check_branch
      %46 = sbr.rel (%p44) target = $region17
    $region16: #{tpu_custom_call.1} parent=1 // pred_region
      %v47 = vld [vmem:[#allocation4] sm:$0xff]
      %v48 = vld [vmem:[#allocation4 + $0x8] sm:$0xff]
      %51 = vrot.lane.b32.xlu0 %v47, 112
      %v52 = vpop.permute.xlu0 %51
      %53 = vrot.lane.b32.xlu0 %v48, 112
      %v54 = vpop.permute.xlu0 %53
      %vm55 = vcmask 916480
      %v56 = vsel %vm55, %v52, %v54
      %v59 = vsub.f32 %v47, %v56
      %v60 = vsub.f32 %v48, %v54
      %v61 = vand.u32 2147483647, %v59
      %v62 = vand.u32 2147483647, %v60
      %63 = vrot.lane.b32.xlu0 %v47, 127
      %v64 = vpop.permute.xlu0 %63
      %65 = vrot.lane.b32.xlu0 %v48, 127
      %v66 = vpop.permute.xlu0 %65
      %vm67 = vcmask 1039360
      %v68 = vsel %vm67, %v64, %v66
      %v71 = vsub.f32 %v47, %v68
      %v72 = vsub.f32 %v48, %v66
      %v73 = vand.u32 2147483647, %v71
      %v74 = vand.u32 2147483647, %v72
      %v75 = vld [vmem:[#allocation2] sm:$0xff]
      %v76 = vld [vmem:[#allocation2 + $0x8] sm:$0xff]
      %v77 = vadd.f32 %v75, %v61
      %v78 = vadd.f32 %v76, %v62
      %79 = vst [vmem:[#allocation2] sm:$0xff] %v77
      %80 = vst.msk [vmem:[#allocation2 + $0x8] sm:$0xff] %vm55, %v78
      %v81 = vld [vmem:[#allocation3] sm:$0xff]
      %v82 = vld [vmem:[#allocation3 + $0x8] sm:$0xff]
      %v83 = vadd.f32 %v81, %v73
      %v84 = vadd.f32 %v82, %v74
      %85 = vst [vmem:[#allocation3] sm:$0xff] %v83
      %86 = vst.msk [vmem:[#allocation3 + $0x8] sm:$0xff] %vm67, %v84
    $region17: #{tpu_custom_call.1} parent=1 // pred_fallthru
      _
    %p87 = scmp.lt.s32.totalorder %s32, 8
    // Predicated region
    $region18: #{tpu_custom_call.1} parent=1 // pred_check
      %p88 = pneg %p87
    $region19: #{tpu_custom_call.1} parent=1 // pred_check_branch
      %90 = sbr.rel (%p88) target = $region21
    $region20: #{tpu_custom_call.1} parent=1 // pred_region
      %v91 = vld [vmem:[#allocation4] sm:$0xff]
      %v92 = vld [vmem:[#allocation4 + $0x8] sm:$0xff]
      %v93 = vlaneseq
      %v94 = vshrl.u32 %v93, 7
      %v95 = vstv %s32
      %vm96 = vcmp.lt.s32.totalorder %v94, %v95
      %v97 = vsel %vm96, 1, 0
      %vm98 = vcmp.eq.s32.totalorder %v97, 1
      %v99 = vsel %vm98, %v91, 0.0
      %v100 = vsel %vm98, %v92, 0.0
      %103 = vrot.lane.b32.xlu0 %v99, 112
      %v104 = vpop.permute.xlu0 %103
      %105 = vrot.lane.b32.xlu0 %v100, 112
      %v106 = vpop.permute.xlu0 %105
      %vm107 = vcmask 916480
      %v108 = vsel %vm107, %v104, %v106
      %v111 = vsub.f32 %v99, %v108
      %v112 = vsub.f32 %v100, %v106
      %v113 = vand.u32 2147483647, %v111
      %v114 = vand.u32 2147483647, %v112
      %115 = vrot.lane.b32.xlu0 %v99, 127
      %v116 = vpop.permute.xlu0 %115
      %117 = vrot.lane.b32.xlu0 %v100, 127
      %v118 = vpop.permute.xlu0 %117
      %vm119 = vcmask 1039360
      %v120 = vsel %vm119, %v116, %v118
      %v123 = vsub.f32 %v99, %v120
      %v124 = vsub.f32 %v100, %v118
      %v125 = vand.u32 2147483647, %v123
      %v126 = vand.u32 2147483647, %v124
      %v127 = vld [vmem:[#allocation2] sm:$0xff]
      %v128 = vld [vmem:[#allocation2 + $0x8] sm:$0xff]
      %v129 = vadd.f32 %v127, %v113
      %v130 = vadd.f32 %v128, %v114
      %131 = vst [vmem:[#allocation2] sm:$0xff] %v129
      %132 = vst.msk [vmem:[#allocation2 + $0x8] sm:$0xff] %vm107, %v130
      %v133 = vld [vmem:[#allocation3] sm:$0xff]
      %v134 = vld [vmem:[#allocation3 + $0x8] sm:$0xff]
      %v135 = vadd.f32 %v133, %v125
      %v136 = vadd.f32 %v134, %v126
      %137 = vst [vmem:[#allocation3] sm:$0xff] %v135
      %138 = vst.msk [vmem:[#allocation3 + $0x8] sm:$0xff] %vm119, %v136
    $region21: #{tpu_custom_call.1} parent=1 // pred_fallthru
      _
    // Predicated region
    $region22: #{tpu_custom_call.1} parent=1 // pred_check
      %p139 = pneg %p33
    $region23: #{tpu_custom_call.1} parent=1 // pred_check_branch
      %141 = sbr.rel (%p139) target = $region25
    $region24: #{tpu_custom_call.1} parent=1 // pred_region
      %v142 = vlaneseq
      %v143 = vand.u32 %v142, 127
      %v144 = vadd.s32 %v143, 128
      %vm145 = vcmp.lt.s32.totalorder %v143, 0
      %v146 = vsub.s32 0, %v143
      %v147 = vsel %vm145, %v146, %v143
      %v148 = vshrl.u32 %v147, 4
      %v149 = vand.u32 %v147, 15
      %v150 = vsub.s32 0, %v149
      %v151 = vsel %vm145, %v150, %v149
      %vm152 = vcmp.lt.s32.totalorder %v144, 0
      %v153 = vsub.s32 0, %v144
      %v154 = vsel %vm152, %v153, %v144
      %v155 = vshrl.u32 %v154, 4
      %v156 = vand.u32 %v154, 15
      %v157 = vsub.s32 0, %v156
      %v158 = vsel %vm152, %v157, %v156
      %vm159 = vcmp.ne.s32.totalorder %v151, 0
      %vm160 = vcmp.ne.s32.totalorder %v158, 0
      %vm161 = vcmp.lt.s32.totalorder %v151, 0
      %vm162 = vcmp.lt.s32.totalorder %v158, 0
      %vm163 = vmand %vm161, %vm159
      %vm164 = vmand %vm162, %vm160
      %v165 = vadd.s32 %v151, 16
      %v166 = vadd.s32 %v158, 16
      %v167 = vsel %vm163, %v165, %v151
      %v168 = vsel %vm164, %v166, %v158
      %vm169 = vcmp.ne.s32.totalorder %v167, 15
      %vm170 = vcmp.ne.s32.totalorder %v168, 15
      %v171 = vsel %vm169, 1, 0
      %v172 = vsel %vm170, 1, 0
      %v173 = vcvt.s32.f32 %v171
      %v174 = vcvt.s32.f32 %v172
      %v175 = vld [vmem:[#allocation2] sm:$0xff]
      %v176 = vld [vmem:[#allocation2 + $0x8] sm:$0xff]
      %vm177 = vcmask 916480
      %v178 = vsel %vm177, %v176, 0.0
      %v179 = vadd.f32 %v175, %v178
      %180 = vadd.xlane.f32.xlu0 %v179
      %v181 = vpop.xlane.xlu0 %180
      %v182 = vrot.slane %v181, 4
      %v183 = vadd.f32 %v181, %v182
      %v184 = vrot.slane %v183, 2
      %v185 = vadd.f32 %v183, %v184
      %v186 = vrot.slane %v185, 1
      %v187 = vadd.f32 %v185, %v186
      %s188 = vtos %v187
      %v189 = vstv %s188
      %190 = vst [vmem:[#allocation7] sm:$0xff] %v189
      %v191 = vld [vmem:[#allocation3] sm:$0xff]
      %v192 = vld [vmem:[#allocation3 + $0x8] sm:$0xff]
      %v193 = vmul.f32 %v191, %v173
      %v194 = vmul.f32 %v192, %v174
      %vm195 = vcmask 1039360
      %v196 = vsel %vm195, %v194, 0.0
      %v197 = vadd.f32 %v193, %v196
      %198 = vadd.xlane.f32.xlu0 %v197
      %v199 = vpop.xlane.xlu0 %198
      %v200 = vrot.slane %v199, 4
      %v201 = vadd.f32 %v199, %v200
      %v202 = vrot.slane %v201, 2
      %v203 = vadd.f32 %v201, %v202
      %v204 = vrot.slane %v203, 1
      %v205 = vadd.f32 %v203, %v204
      %s206 = vtos %v205
      %v207 = vstv %s206
      %s208 = scalar_lea.vmem [#allocation7], 8
      %209 = vst [vmem:[%s208] sm:$0xff] %v207
    $region25: #{tpu_custom_call.1} parent=1 // pred_fallthru
      _
    // Predicated region
    $region26: #{tpu_custom_call.1} parent=1 // pred_check
      _
    $region27: #{tpu_custom_call.1} parent=1 // pred_check_branch
      %211 = sbr.rel (0) target = $region29
    $region28: #{tpu_custom_call.1} parent=1 // pred_region
      %s213 = ssub.s32 256, 256
      %214 = vsyncadd [#allocation6], %s213
      %s215 = sshll.u32 [#allocation7], 4
      %s216 = int_to_ptr.vmem [resolvable:$true] %s215
      %221 = dma.vmem_to_hbm [thread:$0]  %s216, 256, %s1, [#allocation6], 128, 128, 8
    $region29: #{tpu_custom_call.1} parent=1 // pred_fallthru
      _
    // Predicated region
    $region30: #{tpu_custom_call.1} parent=1 // pred_check
      _
    $region31: #{tpu_custom_call.1} parent=1 // pred_check_branch
      %223 = sbr.rel (0) target = $region33
    $region32: #{tpu_custom_call.1} parent=1 // pred_region
      %224 = dma.done [#allocation6], 256
    $region33: #{tpu_custom_call.1} parent=1 // pred_fallthru
      _
    %225 = vsyncpa [#allocation5], 1
    %226 = vsyncpa [#allocation6], 1

</llo_original>
